<compile_context>
chip_gen: v5e
topology: v5e:2x2
jax: 0.10.0
libtpu: 0.0.40
codegen_flags: <defaults>
</compile_context>

<pallas_src>
import jax
import jax.numpy as jnp
from jax.experimental import pallas as pl
from jax.experimental.pallas import tpu as pltpu


def _round_up(x: int, m: int) -> int:
    return ((x + m - 1) // m) * m


def _policy_mlp_kernel(obs_ref, w1_ref, b1_ref, w2_ref, b2_ref, out_ref):
    # obs_ref : [TILE_B, S_p]  bf16  (pipelined per grid step)
    # w1_ref  : [S_p, H_p]     bf16  (VMEM-resident, constant index_map)
    # b1_ref  : [1, H_p]       f32
    # w2_ref  : [H_p, A_p]     bf16
    # b2_ref  : [1, A_p]       f32
    # out_ref : [TILE_B, A_p]  f32   (lane-dense: A_p multiple of 128)
    h = jnp.dot(obs_ref[...], w1_ref[...], preferred_element_type=jnp.float32)
    h = jnp.tanh(h + b1_ref[...])                      # bias + tanh in f32 (VPU/EUP)
    logits = jnp.dot(h.astype(jnp.bfloat16), w2_ref[...],
                     preferred_element_type=jnp.float32)
    out_ref[...] = (logits + b2_ref[...]).astype(out_ref.dtype)


def policy_forward(obs, w1, b1, w2, b2, *, tile_b: int = 512):
    """Run the policy head on TPU via a batch-tiled Pallas kernel.

    obs: [B, S] float32
    w1:  [S, H] float32, b1: [1, H] float32
    w2:  [H, A] float32, b2: [1, A] float32
    returns logits: [B, A] float32
    """
    B, S = obs.shape
    H = w1.shape[1]
    A = w2.shape[1]

    # Lane-dense padding of the feature dims (zeros are mathematically inert).
    S_p = _round_up(S, 128)
    H_p = _round_up(H, 128)
    A_p = _round_up(A, 128)

    # Batch tile: multiple of 16 (bf16 sublane packing), capped by the padded batch.
    tile_b = max(16, min(_round_up(tile_b, 16), _round_up(B, 16)))
    B_p = _round_up(B, tile_b)

    # Zero-pad; cast matmul operands to bf16 (f32 accumulation inside the kernel).
    obs_p = jnp.pad(obs.astype(jnp.bfloat16), ((0, B_p - B), (0, S_p - S)))
    w1_p = jnp.pad(w1.astype(jnp.bfloat16), ((0, S_p - S), (0, H_p - H)))
    b1_p = jnp.pad(b1.astype(jnp.float32), ((0, 0), (0, H_p - H)))
    w2_p = jnp.pad(w2.astype(jnp.bfloat16), ((0, H_p - H), (0, A_p - A)))
    b2_p = jnp.pad(b2.astype(jnp.float32), ((0, 0), (0, A_p - A)))

    grid = (B_p // tile_b,)

    cost = pl.CostEstimate(
        flops=2 * B_p * (S_p * H_p + H_p * A_p),
        transcendentals=B_p * H_p,
        bytes_accessed=(obs_p.size * 2 + w1_p.size * 2 + w2_p.size * 2
                        + b1_p.size * 4 + b2_p.size * 4 + B_p * A_p * 4),
    )

    out = pl.pallas_call(
        _policy_mlp_kernel,
        out_shape=jax.ShapeDtypeStruct((B_p, A_p), jnp.float32),
        grid_spec=pltpu.PrefetchScalarGridSpec(
            num_scalar_prefetch=0,
            grid=grid,
            in_specs=[
                pl.BlockSpec((tile_b, S_p), lambda i: (i, 0)),  # obs tile (pipelined)
                pl.BlockSpec((S_p, H_p), lambda i: (0, 0)),     # weights stay resident
                pl.BlockSpec((1, H_p), lambda i: (0, 0)),
                pl.BlockSpec((H_p, A_p), lambda i: (0, 0)),
                pl.BlockSpec((1, A_p), lambda i: (0, 0)),
            ],
            out_specs=pl.BlockSpec((tile_b, A_p), lambda i: (i, 0)),
        ),
        compiler_params=pltpu.CompilerParams(
            # Batch axis is embarrassingly parallel -> v7x's 2 TCs split it;
            # harmless on single-TC v5e/v6e.
            dimension_semantics=("parallel",),
        ),
        cost_estimate=cost,
    )(obs_p, w1_p, b1_p, w2_p, b2_p)

    return out[:B, :A]


def init_policy_params(key, state_dim, hidden_dim, n_actions):
    """Deterministic parameter initialization (Glorot-ish uniform)."""
    k1, k2, k3, k4 = jax.random.split(key, 4)
    lim1 = 1.0 / jnp.sqrt(jnp.float32(state_dim))
    lim2 = 1.0 / jnp.sqrt(jnp.float32(hidden_dim))
    w1 = jax.random.uniform(k1, (state_dim, hidden_dim), jnp.float32, -lim1, lim1)
    b1 = jax.random.uniform(k2, (1, hidden_dim), jnp.float32, -lim1, lim1)
    w2 = jax.random.uniform(k3, (hidden_dim, n_actions), jnp.float32, -lim2, lim2)
    b2 = jax.random.uniform(k4, (1, n_actions), jnp.float32, -lim2, lim2)
    return w1, b1, w2, b2


if __name__ == "__main__":
    # Small RL-policy-head shapes; B=48 with tile_b=16 exercises a 3-step grid.
    # NOTE: at real rollout/training batch sizes, call with the default
    # tile_b=512 (amortizes per-call / per-grid-step overhead).
    B, S, H, A = 48, 32, 32, 8

    key = jax.random.PRNGKey(0)
    k_obs, k_params = jax.random.split(key)
    obs = jax.random.normal(k_obs, (B, S), jnp.float32)
    w1, b1, w2, b2 = init_policy_params(k_params, S, H, A)

    logits = policy_forward(obs, w1, b1, w2, b2, tile_b=16)
    jax.block_until_ready(logits)
    assert logits.shape == (B, A)

    # Reference matching the kernel's numerics: bf16 matmul operands with f32
    # accumulation, biases/tanh in f32.
    q = lambda x: x.astype(jnp.bfloat16).astype(jnp.float32)
    h_ref = jnp.tanh(q(obs) @ q(w1) + b1)
    ref = q(h_ref) @ q(w2) + b2
    err = float(jnp.max(jnp.abs(logits - ref)))
    assert jnp.allclose(logits, ref, atol=1e-2, rtol=1e-2), err

    # Loose sanity check against the pure-f32 forward as well.
    ref_f32 = jnp.tanh(obs @ w1 + b1) @ w2 + b2
    assert jnp.allclose(logits, ref_f32, atol=5e-2, rtol=5e-2)

    print("KERNEL_OK")
</pallas_src>

<mosaic_0001>
module attributes {stable_mosaic.version = 11 : i64} {
  func.func @_policy_mlp_kernel(%arg0: i32, %arg1: memref<16x128xbf16, #tpu.memory_space<vmem>>, %arg2: memref<128x128xbf16, #tpu.memory_space<vmem>>, %arg3: memref<1x128xf32, #tpu.memory_space<vmem>>, %arg4: memref<128x128xbf16, #tpu.memory_space<vmem>>, %arg5: memref<1x128xf32, #tpu.memory_space<vmem>>, %arg6: memref<16x128xf32, #tpu.memory_space<vmem>>) attributes {dimension_semantics = [#tpu.dimension_semantics<parallel>], iteration_bounds = array<i64: 3>, scalar_prefetch = 0 : i64, scratch_operands = 0 : i64, tpu.core_type = #tpu.core_type<tc>, window_params = [{transform_indices = @transform_0, window_bounds = array<i64: 16, 128>}, {pipeline_mode = #tpu.pipeline_mode<synchronous>, transform_indices = @transform_1, window_bounds = array<i64: 128, 128>}, {pipeline_mode = #tpu.pipeline_mode<synchronous>, transform_indices = @transform_2, window_bounds = array<i64: 1, 128>}, {pipeline_mode = #tpu.pipeline_mode<synchronous>, transform_indices = @transform_3, window_bounds = array<i64: 128, 128>}, {pipeline_mode = #tpu.pipeline_mode<synchronous>, transform_indices = @transform_4, window_bounds = array<i64: 1, 128>}, {transform_indices = @transform_5, window_bounds = array<i64: 16, 128>}]} {
    %c0 = arith.constant 0 : index
    %c0_0 = arith.constant 0 : index
    %0 = vector.load %arg1[%c0, %c0_0] : memref<16x128xbf16, #tpu.memory_space<vmem>>, vector<16x128xbf16>
    %c0_1 = arith.constant 0 : index
    %c0_2 = arith.constant 0 : index
    %1 = vector.load %arg2[%c0_1, %c0_2] : memref<128x128xbf16, #tpu.memory_space<vmem>>, vector<128x128xbf16>
    %cst = arith.constant dense<0.000000e+00> : vector<16x128xf32>
    %2 = tpu.matmul %0, %1, %cst {dimension_numbers = #tpu.dot_dimension_numbers<[1], [0], [0], [1], [0, 0, 1, 1], [], []>} : vector<16x128xbf16>, vector<128x128xbf16>, vector<16x128xf32> -> vector<16x128xf32>
    %c0_3 = arith.constant 0 : index
    %c0_4 = arith.constant 0 : index
    %3 = vector.load %arg3[%c0_3, %c0_4] : memref<1x128xf32, #tpu.memory_space<vmem>>, vector<1x128xf32>
    %4 = vector.broadcast %3 : vector<1x128xf32> to vector<16x128xf32>
    %5 = arith.addf %2, %4 : vector<16x128xf32>
    %6 = math.tanh %5 : vector<16x128xf32>
    %7 = arith.truncf %6 : vector<16x128xf32> to vector<16x128xbf16>
    %c0_5 = arith.constant 0 : index
    %c0_6 = arith.constant 0 : index
    %8 = vector.load %arg4[%c0_5, %c0_6] : memref<128x128xbf16, #tpu.memory_space<vmem>>, vector<128x128xbf16>
    %cst_7 = arith.constant dense<0.000000e+00> : vector<16x128xf32>
    %9 = tpu.matmul %7, %8, %cst_7 {dimension_numbers = #tpu.dot_dimension_numbers<[1], [0], [0], [1], [0, 0, 1, 1], [], []>} : vector<16x128xbf16>, vector<128x128xbf16>, vector<16x128xf32> -> vector<16x128xf32>
    %c0_8 = arith.constant 0 : index
    %c0_9 = arith.constant 0 : index
    %10 = vector.load %arg5[%c0_8, %c0_9] : memref<1x128xf32, #tpu.memory_space<vmem>>, vector<1x128xf32>
    %11 = vector.broadcast %10 : vector<1x128xf32> to vector<16x128xf32>
    %12 = arith.addf %9, %11 : vector<16x128xf32>
    %c0_10 = arith.constant 0 : index
    %c0_11 = arith.constant 0 : index
    %13 = vector.load %arg6[%c0_10, %c0_11] : memref<16x128xf32, #tpu.memory_space<vmem>>, vector<16x128xf32>
    tpu.vector_store %arg6[%c0_10, %c0_11], %12 {strides = array<i32>} : memref<16x128xf32, #tpu.memory_space<vmem>>, vector<16x128xf32>,
    return
  }
  func.func @transform_0(%arg0: i32) -> (i32, i32) {
    %c0_i32 = arith.constant 0 : i32
    %c0_i32_0 = arith.constant 0 : i32
    return %arg0, %c0_i32 : i32, i32
  }
  func.func @transform_1(%arg0: i32) -> (i32, i32) {
    %c0_i32 = arith.constant 0 : i32
    %c0_i32_0 = arith.constant 0 : i32
    %c0_i32_1 = arith.constant 0 : i32
    return %c0_i32, %c0_i32_0 : i32, i32
  }
  func.func @transform_2(%arg0: i32) -> (i32, i32) {
    %c0_i32 = arith.constant 0 : i32
    %c0_i32_0 = arith.constant 0 : i32
    %c0_i32_1 = arith.constant 0 : i32
    return %c0_i32, %c0_i32_0 : i32, i32
  }
  func.func @transform_3(%arg0: i32) -> (i32, i32) {
    %c0_i32 = arith.constant 0 : i32
    %c0_i32_0 = arith.constant 0 : i32
    %c0_i32_1 = arith.constant 0 : i32
    return %c0_i32, %c0_i32_0 : i32, i32
  }
  func.func @transform_4(%arg0: i32) -> (i32, i32) {
    %c0_i32 = arith.constant 0 : i32
    %c0_i32_0 = arith.constant 0 : i32
    %c0_i32_1 = arith.constant 0 : i32
    return %c0_i32, %c0_i32_0 : i32, i32
  }
  func.func @transform_5(%arg0: i32) -> (i32, i32) {
    %c0_i32 = arith.constant 0 : i32
    %c0_i32_0 = arith.constant 0 : i32
    return %arg0, %c0_i32 : i32, i32
  }
}

</mosaic_0001>

<llo_original>
// kernel: tpu_custom_call.1
$region0: #{tpu_custom_call.1}
  #allocation0 [shape = 'u32[]', space=smem, size = 0x4, offset = 0x4, fixed_abs, tag = 'smem constant byte address 0x4 - core index']
  #allocation1 [shape = 'u32[72,128]{1,0:T(1,128)}', space=vmem, size = 0x9000, scoped, tag = 'internal scratch']
  %s0 = inlined_call_operand.hbm [shape: bf16[48,128], index: 0, kind: input, shape index: {}]
  %s1 = inlined_call_operand.hbm [shape: bf16[128,128], index: 1, kind: input, shape index: {}]
  %s2 = inlined_call_operand.vmem [shape: f32[1,128], index: 2, kind: input, shape index: {}]
  %s3 = inlined_call_operand.hbm [shape: bf16[128,128], index: 3, kind: input, shape index: {}]
  %s4 = inlined_call_operand.vmem [shape: f32[1,128], index: 4, kind: input, shape index: {}]
  %s5 = inlined_call_operand.hbm [shape: f32[48,128], index: 5, kind: output, shape index: {}]
  %s6 = sld [smem:[#allocation0]]
  $region65: #{tpu_custom_call.1} parent=0
    _
  %s8 = ssub.s32 1, %s6
  %s9 = scalar_select 0, %s8, %s6
  $region1: #{tpu_custom_call.1} parent=0
    #allocation2 [shape = 'u8[8192]{0}', space=vmem, size = 0x2000, scoped, tag = 'input window, operand 0']
    #allocation3 [shape = 's32[2]{0}', space=sflag, size = 0x8, scoped, tag = 'scoped memory for tpu_custom_call.1']
    #allocation4 [shape = 's32[2]{0}', space=sflag, size = 0x8, scoped, tag = 'scoped memory for tpu_custom_call.1']
    #allocation5 [shape = 'u8[32768]{0}', space=vmem, size = 0x8000, scoped, tag = 'input window, operand 1, single buffered']
    #allocation6 [shape = 's32[1]{0}', space=sflag, size = 0x4, scoped, tag = 'scoped memory for tpu_custom_call.1']
    #allocation7 [shape = 'u8[32768]{0}', space=vmem, size = 0x8000, scoped, tag = 'input window, operand 3, single buffered']
    #allocation8 [shape = 'u8[16384]{0}', space=vmem, size = 0x4000, scoped, tag = 'output window, operand 0']
    %10 = vsyncpa [#allocation3], 0
    %s11 = scalar_lea.sflag [#allocation3], 1
    %12 = vsyncpa %s11, 0
    %13 = vsyncpa [#allocation6], 0
    %14 = vsyncpa [#allocation4], 0
    %s15 = scalar_lea.sflag [#allocation4], 1
    %16 = vsyncpa %s15, 0
    loop: start=0, step=1, limit=5
    $region2: #{tpu_custom_call.1} parent=1 // loop_pre_header
      _
    $region3: #{tpu_custom_call.1} parent=1 // loop_header
      %s18 = sphi 0, %s22
      %p19 = scmp.ge.s32.totalorder %s18, 5
      %s28 = sphi 0, %s30
      %s31 = sphi 0, %s28
      %s32 = sphi 0, %s31
      %s48 = sphi 0, %s32
      %s52 = sphi 0, %s52
      %s54 = sphi 0, %s52
      %s55 = sphi 0, %s54
      %s69 = sphi 0, %s55
      %s73 = sphi 0, %s73
      %s75 = sphi 0, %s73
      %s76 = sphi 0, %s75
      %s90 = sphi 0, %s76
      %s94 = sphi 0, %s94
      %s96 = sphi 0, %s94
      %s97 = sphi 0, %s96
      %s111 = sphi 0, %s97
      %s115 = sphi 0, %s115
      %s117 = sphi 0, %s115
      %s118 = sphi 0, %s117
      %s132 = sphi 0, %s118
      %s138 = sphi 0, %s140
      %s141 = sphi 0, %s138
      %s142 = sphi 0, %s141
      %s158 = sphi 0, %s142
    $region4: #{tpu_custom_call.1} parent=1 // loop_header_branch
      %21 = sbr.rel (%p19) target = $region8
    $region5: #{tpu_custom_call.1} parent=1 // loop_body
      %s23 = ssub.s32 %s18, 1
      %s24 = ssub.s32 %s18, 2
      %s25 = sadd.s32 %s18, 1
      %s26 = ssub.s32 %s18, %s25
      %p27 = scmp.eq.s32.totalorder %s26, 0
      %s29 = sadd.s32 %s28, 1
      %s30 = scalar_select %p27, %s28, %s29
      %p33 = pneg %p27
      %p34 = scmp.eq.s32.totalorder %s18, 2
      %p35 = por %p33, %p34
      %p36 = scmp.ne.s32.totalorder %s28, %s31
      %p37 = scmp.eq.s32.totalorder %s18, 0
      %p38 = por %p36, %p37
      %p39 = scmp.ne.s32.totalorder %s28, %s31
      %p40 = scmp.eq.s32.totalorder %s23, 2
      %p41 = por %p39, %p40
      %p42 = scmp.ne.s32.totalorder %s31, %s32
      %p43 = scmp.eq.s32.totalorder %s23, 0
      %p44 = por %p42, %p43
      %p45 = scmp.ne.s32.totalorder %s31, %s32
      %p46 = scmp.eq.s32.totalorder %s24, 2
      %p47 = por %p45, %p46
      %p49 = scmp.ne.s32.totalorder %s32, %s48
      %p50 = scmp.eq.s32.totalorder %s24, 0
      %p51 = por %p49, %p50
      %s53 = sadd.s32 %s52, 1
      %p56 = scmp.eq.s32.totalorder %s18, 2
      %p57 = scmp.ne.s32.totalorder %s52, %s54
      %p58 = scmp.eq.s32.totalorder %s18, 0
      %p59 = por %p57, %p58
      %p60 = scmp.ne.s32.totalorder %s52, %s54
      %p61 = scmp.eq.s32.totalorder %s23, 2
      %p62 = por %p60, %p61
      %p63 = scmp.ne.s32.totalorder %s54, %s55
      %p64 = scmp.eq.s32.totalorder %s23, 0
      %p65 = por %p63, %p64
      %p66 = scmp.ne.s32.totalorder %s54, %s55
      %p67 = scmp.eq.s32.totalorder %s24, 2
      %p68 = por %p66, %p67
      %p70 = scmp.ne.s32.totalorder %s55, %s69
      %p71 = scmp.eq.s32.totalorder %s24, 0
      %p72 = por %p70, %p71
      %s74 = sadd.s32 %s73, 1
      %p77 = scmp.eq.s32.totalorder %s18, 2
      %p78 = scmp.ne.s32.totalorder %s73, %s75
      %p79 = scmp.eq.s32.totalorder %s18, 0
      %p80 = por %p78, %p79
      %p81 = scmp.ne.s32.totalorder %s73, %s75
      %p82 = scmp.eq.s32.totalorder %s23, 2
      %p83 = por %p81, %p82
      %p84 = scmp.ne.s32.totalorder %s75, %s76
      %p85 = scmp.eq.s32.totalorder %s23, 0
      %p86 = por %p84, %p85
      %p87 = scmp.ne.s32.totalorder %s75, %s76
      %p88 = scmp.eq.s32.totalorder %s24, 2
      %p89 = por %p87, %p88
      %p91 = scmp.ne.s32.totalorder %s76, %s90
      %p92 = scmp.eq.s32.totalorder %s24, 0
      %p93 = por %p91, %p92
      %s95 = sadd.s32 %s94, 1
      %p98 = scmp.eq.s32.totalorder %s18, 2
      %p99 = scmp.ne.s32.totalorder %s94, %s96
      %p100 = scmp.eq.s32.totalorder %s18, 0
      %p101 = por %p99, %p100
      %p102 = scmp.ne.s32.totalorder %s94, %s96
      %p103 = scmp.eq.s32.totalorder %s23, 2
      %p104 = por %p102, %p103
      %p105 = scmp.ne.s32.totalorder %s96, %s97
      %p106 = scmp.eq.s32.totalorder %s23, 0
      %p107 = por %p105, %p106
      %p108 = scmp.ne.s32.totalorder %s96, %s97
      %p109 = scmp.eq.s32.totalorder %s24, 2
      %p110 = por %p108, %p109
      %p112 = scmp.ne.s32.totalorder %s97, %s111
      %p113 = scmp.eq.s32.totalorder %s24, 0
      %p114 = por %p112, %p113
      %s116 = sadd.s32 %s115, 1
      %p119 = scmp.eq.s32.totalorder %s18, 2
      %p120 = scmp.ne.s32.totalorder %s115, %s117
      %p121 = scmp.eq.s32.totalorder %s18, 0
      %p122 = por %p120, %p121
      %p123 = scmp.ne.s32.totalorder %s115, %s117
      %p124 = scmp.eq.s32.totalorder %s23, 2
      %p125 = por %p123, %p124
      %p126 = scmp.ne.s32.totalorder %s117, %s118
      %p127 = scmp.eq.s32.totalorder %s23, 0
      %p128 = por %p126, %p127
      %p129 = scmp.ne.s32.totalorder %s117, %s118
      %p130 = scmp.eq.s32.totalorder %s24, 2
      %p131 = por %p129, %p130
      %p133 = scmp.ne.s32.totalorder %s118, %s132
      %p134 = scmp.eq.s32.totalorder %s24, 0
      %p135 = por %p133, %p134
      %s136 = ssub.s32 %s18, %s25
      %p137 = scmp.eq.s32.totalorder %s136, 0
      %s139 = sadd.s32 %s138, 1
      %s140 = scalar_select %p137, %s138, %s139
      %p143 = pneg %p137
      %p144 = scmp.eq.s32.totalorder %s18, 2
      %p145 = por %p143, %p144
      %p146 = scmp.ne.s32.totalorder %s138, %s141
      %p147 = scmp.eq.s32.totalorder %s18, 0
      %p148 = por %p146, %p147
      %p149 = scmp.ne.s32.totalorder %s138, %s141
      %p150 = scmp.eq.s32.totalorder %s23, 2
      %p151 = por %p149, %p150
      %p152 = scmp.ne.s32.totalorder %s141, %s142
      %p153 = scmp.eq.s32.totalorder %s23, 0
      %p154 = por %p152, %p153
      %p155 = scmp.ne.s32.totalorder %s141, %s142
      %p156 = scmp.eq.s32.totalorder %s24, 2
      %p157 = por %p155, %p156
      %p159 = scmp.ne.s32.totalorder %s142, %s158
      %p160 = scmp.eq.s32.totalorder %s24, 0
      %p161 = por %p159, %p160
      %p162 = scmp.le.s32.totalorder 1, %s18
      %p163 = scmp.lt.s32.totalorder %s18, 4
      %p164 = pnand %p162, %p163
      %p165 = pneg %p164
      // Predicated region
      $region9: #{tpu_custom_call.1} parent=5 // pred_check
        _
      $region10: #{tpu_custom_call.1} parent=5 // pred_check_branch
        %167 = sbr.rel (%p164) target = $region12
      $region11: #{tpu_custom_call.1} parent=5 // pred_region
        %s168 = ssub.s32 %s18, 1
        // Predicated region
        $region13: #{tpu_custom_call.1} parent=11 // pred_check
          %p169 = pneg %p65
        $region14: #{tpu_custom_call.1} parent=11 // pred_check_branch
          %171 = sbr.rel (%p169) target = $region16
        $region15: #{tpu_custom_call.1} parent=11 // pred_region
          %173 = vsyncadd [#allocation6], 0
          %s174 = sshll.u32 %s1, 4
          %s175 = int_to_ptr.hbm [resolvable:$true] %s174
          %s176 = sshll.u32 [#allocation5], 4
          %s177 = int_to_ptr.vmem [resolvable:$true] %s176
          %182 = dma.hbm_to_vmem [thread:$0]  %s175, 1024, %s177, [#allocation6], 64, 64, 4
        $region16: #{tpu_custom_call.1} parent=11 // pred_fallthru
          _
        // Predicated region
        $region17: #{tpu_custom_call.1} parent=11 // pred_check
          %p183 = pneg %p86
        $region18: #{tpu_custom_call.1} parent=11 // pred_check_branch
          %185 = sbr.rel (%p183) target = $region20
        $region19: #{tpu_custom_call.1} parent=11 // pred_region
          _
        $region20: #{tpu_custom_call.1} parent=11 // pred_fallthru
          _
        // Predicated region
        $region21: #{tpu_custom_call.1} parent=11 // pred_check
          %p186 = pneg %p107
        $region22: #{tpu_custom_call.1} parent=11 // pred_check_branch
          %188 = sbr.rel (%p186) target = $region24
        $region23: #{tpu_custom_call.1} parent=11 // pred_region
          %190 = vsyncadd [#allocation6], 0
          %s191 = sshll.u32 %s3, 4
          %s192 = int_to_ptr.hbm [resolvable:$true] %s191
          %s193 = sshll.u32 [#allocation7], 4
          %s194 = int_to_ptr.vmem [resolvable:$true] %s193
          %199 = dma.hbm_to_vmem [thread:$0]  %s192, 1024, %s194, [#allocation6], 64, 64, 4
        $region24: #{tpu_custom_call.1} parent=11 // pred_fallthru
          _
        // Predicated region
        $region25: #{tpu_custom_call.1} parent=11 // pred_check
          %p200 = pneg %p128
        $region26: #{tpu_custom_call.1} parent=11 // pred_check_branch
          %202 = sbr.rel (%p200) target = $region28
        $region27: #{tpu_custom_call.1} parent=11 // pred_region
          _
        $region28: #{tpu_custom_call.1} parent=11 // pred_fallthru
          _
      $region12: #{tpu_custom_call.1} parent=5 // pred_fallthru
        _
      %p203 = scmp.lt.s32.totalorder %s18, 3
      // Predicated region
      $region29: #{tpu_custom_call.1} parent=5 // pred_check
        %p204 = pneg %p203
      $region30: #{tpu_custom_call.1} parent=5 // pred_check_branch
        %206 = sbr.rel (%p204) target = $region32
      $region31: #{tpu_custom_call.1} parent=5 // pred_region
        // Predicated region
        $region33: #{tpu_custom_call.1} parent=31 // pred_check
          %p207 = pneg %p38
        $region34: #{tpu_custom_call.1} parent=31 // pred_check_branch
          %209 = sbr.rel (%p207) target = $region36
        $region35: #{tpu_custom_call.1} parent=31 // pred_region
          %s210 = sand.u32 %s28, 1
          %s211 = scalar_lea.sflag [#allocation3], %s210
          %s212 = sand.u32 %s28, 1
          %s213 = smul.addr %s212, 8
          %s214 = scalar_lea.vmem [#allocation2], %s213
          %s215 = smul.u32 2, %s18
          %217 = vsyncadd %s211, 0
          %s218 = smul.addr %s215, 4
          %s219 = scalar_lea.hbm %s0, %s218
          %s220 = sshll.u32 %s219, 4
          %s221 = int_to_ptr.hbm [resolvable:$true] %s220
          %s222 = sshll.u32 %s214, 4
          %s223 = int_to_ptr.vmem [resolvable:$true] %s222
          %228 = dma.hbm_to_vmem [thread:$0]  %s221, 128, %s223, %s211, 64, 64, 4
        $region36: #{tpu_custom_call.1} parent=31 // pred_fallthru
          _
      $region32: #{tpu_custom_call.1} parent=5 // pred_fallthru
        _
      %p229 = scmp.le.s32.totalorder 1, %s18
      %p230 = scmp.lt.s32.totalorder %s18, 4
      %p231 = pnand %p229, %p230
      %p232 = pneg %p231
      // Predicated region
      $region37: #{tpu_custom_call.1} parent=5 // pred_check
        _
      $region38: #{tpu_custom_call.1} parent=5 // pred_check_branch
        %234 = sbr.rel (%p231) target = $region40
      $region39: #{tpu_custom_call.1} parent=5 // pred_region
        %s235 = ssub.s32 %s18, 1
        %s236 = sand.u32 %s31, 1
        %s237 = scalar_lea.sflag [#allocation3], %s236
        %s238 = sand.u32 %s31, 1
        %s239 = smul.addr %s238, 8
        %s240 = scalar_lea.vmem [#allocation2], %s239
        // Predicated region
        $region41: #{tpu_custom_call.1} parent=39 // pred_check
          %p241 = pneg %p44
        $region42: #{tpu_custom_call.1} parent=39 // pred_check_branch
          %243 = sbr.rel (%p241) target = $region44
        $region43: #{tpu_custom_call.1} parent=39 // pred_region
          %245 = dma.done %s237, 128
        $region44: #{tpu_custom_call.1} parent=39 // pred_fallthru
          _
        // Predicated region
        $region45: #{tpu_custom_call.1} parent=39 // pred_check
          %p246 = pneg %p65
        $region46: #{tpu_custom_call.1} parent=39 // pred_check_branch
          %248 = sbr.rel (%p246) target = $region48
        $region47: #{tpu_custom_call.1} parent=39 // pred_region
          %250 = dma.done [#allocation6], 1024
        $region48: #{tpu_custom_call.1} parent=39 // pred_fallthru
          _
        // Predicated region
        $region49: #{tpu_custom_call.1} parent=39 // pred_check
          %p251 = pneg %p107
        $region50: #{tpu_custom_call.1} parent=39 // pred_check_branch
          %253 = sbr.rel (%p251) target = $region52
        $region51: #{tpu_custom_call.1} parent=39 // pred_region
          %255 = dma.done [#allocation6], 1024
        $region52: #{tpu_custom_call.1} parent=39 // pred_fallthru
          _
        %s256 = sand.u32 %s31, 1
        %s257 = scalar_lea.sflag [#allocation3], %s256
        %s258 = sand.u32 %s31, 1
        %s259 = smul.addr %s258, 8
        %s260 = scalar_lea.vmem [#allocation2], %s259
        %p261 = pneg %p44
        %p262 = pneg %p41
        %p263 = pneg %p65
        %p264 = pneg %p62
        %p265 = pneg %p86
        %p266 = pneg %p83
        %p267 = pneg %p107
        %p268 = pneg %p104
        %p269 = pneg %p128
        %p270 = pneg %p125
        %p271 = pneg %p154
        %p272 = pneg %p151
        %s273 = sand.u32 %s141, 1
        %s274 = scalar_lea.sflag [#allocation4], %s273
        %s275 = sand.u32 %s141, 1
        %s276 = smul.addr %s275, 16
        %s277 = scalar_lea.vmem [#allocation8], %s276
        %s278 = smul.u32 2, %s23
        %s279 = smul.u32 2, %s23
        %v280 = vld [vmem:[%s240] sm:$0xf]
        %v281 = vld [vmem:[%s240 + $0x4] sm:$0xf]
        %v282 = vld [vmem:[#allocation5] sm:$0xf]
        %v283 = vld [vmem:[#allocation5 + $0x4] sm:$0xf]
        %v284 = vld [vmem:[#allocation5 + $0x8] sm:$0xf]
        %v285 = vld [vmem:[#allocation5 + $0xc] sm:$0xf]
        %v286 = vld [vmem:[#allocation5 + $0x10] sm:$0xf]
        %v287 = vld [vmem:[#allocation5 + $0x14] sm:$0xf]
        %v288 = vld [vmem:[#allocation5 + $0x18] sm:$0xf]
        %v289 = vld [vmem:[#allocation5 + $0x1c] sm:$0xf]
        %v290 = vld [vmem:[#allocation5 + $0x20] sm:$0xf]
        %v291 = vld [vmem:[#allocation5 + $0x24] sm:$0xf]
        %v292 = vld [vmem:[#allocation5 + $0x28] sm:$0xf]
        %v293 = vld [vmem:[#allocation5 + $0x2c] sm:$0xf]
        %v294 = vld [vmem:[#allocation5 + $0x30] sm:$0xf]
        %v295 = vld [vmem:[#allocation5 + $0x34] sm:$0xf]
        %v296 = vld [vmem:[#allocation5 + $0x38] sm:$0xf]
        %v297 = vld [vmem:[#allocation5 + $0x3c] sm:$0xf]
        %v298 = vld [vmem:[%s2] sm:$0x1]
        %v300 = vperm.slane %v298, 0
        %v304 = vunpack.c.l.b16 %v280
        %v305 = vunpack.c.l.b16 %v281
        %v306 = vpack.c.b16 %v305, %v304
        %v324 = vunpack.c.l.b16 %v282
        %v325 = vunpack.c.l.b16 %v283
        %v326 = vunpack.c.l.b16 %v284
        %v327 = vunpack.c.l.b16 %v285
        %v328 = vunpack.c.l.b16 %v286
        %v329 = vunpack.c.l.b16 %v287
        %v330 = vunpack.c.l.b16 %v288
        %v331 = vunpack.c.l.b16 %v289
        %v332 = vunpack.c.l.b16 %v290
        %v333 = vunpack.c.l.b16 %v291
        %v334 = vunpack.c.l.b16 %v292
        %v335 = vunpack.c.l.b16 %v293
        %v336 = vunpack.c.l.b16 %v294
        %v337 = vunpack.c.l.b16 %v295
        %v338 = vunpack.c.l.b16 %v296
        %v339 = vunpack.c.l.b16 %v297
        %v340 = vpack.c.b16 %v325, %v324
        %v341 = vpack.c.b16 %v327, %v326
        %v342 = vpack.c.b16 %v329, %v328
        %v343 = vpack.c.b16 %v331, %v330
        %v344 = vpack.c.b16 %v333, %v332
        %v345 = vpack.c.b16 %v335, %v334
        %v346 = vpack.c.b16 %v337, %v336
        %v347 = vpack.c.b16 %v339, %v338
        %356 = vmatpush.bf16.msra.mxu0 %v347
        %357 = vmatpush.bf16.msra.mxu0 %v346
        %358 = vmatpush.bf16.msra.mxu0 %v345
        %359 = vmatpush.bf16.msra.mxu0 %v344
        %360 = vmatpush.bf16.msra.mxu0 %v343
        %361 = vmatpush.bf16.msra.mxu0 %v342
        %362 = vmatpush.bf16.msra.mxu0 %v341
        %363 = vmatpush.bf16.msra.mxu0 %v340
        %364 = vmatmul.bf16.gmra.mxu0 %v306
        %v365 = vpop.f32.mrf.mxu0
        %v366 = vadd.f32 %v300, %v365
        %v367 = vpop.f32.mrf.mxu0
        %v368 = vadd.f32 %v300, %v367
        %369 = vdwg.mxu0
        %v370 = vtanh.pop %v366
        %v371 = vtanh.pop %v368
        %v372 = vpack.c.bf16 %v371, %v370
        %v373 = vld [vmem:[#allocation7] sm:$0xf]
        %v374 = vld [vmem:[#allocation7 + $0x4] sm:$0xf]
        %v375 = vld [vmem:[#allocation7 + $0x8] sm:$0xf]
        %v376 = vld [vmem:[#allocation7 + $0xc] sm:$0xf]
        %v377 = vld [vmem:[#allocation7 + $0x10] sm:$0xf]
        %v378 = vld [vmem:[#allocation7 + $0x14] sm:$0xf]
        %v379 = vld [vmem:[#allocation7 + $0x18] sm:$0xf]
        %v380 = vld [vmem:[#allocation7 + $0x1c] sm:$0xf]
        %v381 = vld [vmem:[#allocation7 + $0x20] sm:$0xf]
        %v382 = vld [vmem:[#allocation7 + $0x24] sm:$0xf]
        %v383 = vld [vmem:[#allocation7 + $0x28] sm:$0xf]
        %v384 = vld [vmem:[#allocation7 + $0x2c] sm:$0xf]
        %v385 = vld [vmem:[#allocation7 + $0x30] sm:$0xf]
        %v386 = vld [vmem:[#allocation7 + $0x34] sm:$0xf]
        %v387 = vld [vmem:[#allocation7 + $0x38] sm:$0xf]
        %v388 = vld [vmem:[#allocation7 + $0x3c] sm:$0xf]
        %v389 = vld [vmem:[%s4] sm:$0x1]
        %v391 = vperm.slane %v389, 0
        %v409 = vunpack.c.l.b16 %v373
        %v410 = vunpack.c.l.b16 %v374
        %v411 = vunpack.c.l.b16 %v375
        %v412 = vunpack.c.l.b16 %v376
        %v413 = vunpack.c.l.b16 %v377
        %v414 = vunpack.c.l.b16 %v378
        %v415 = vunpack.c.l.b16 %v379
        %v416 = vunpack.c.l.b16 %v380
        %v417 = vunpack.c.l.b16 %v381
        %v418 = vunpack.c.l.b16 %v382
        %v419 = vunpack.c.l.b16 %v383
        %v420 = vunpack.c.l.b16 %v384
        %v421 = vunpack.c.l.b16 %v385
        %v422 = vunpack.c.l.b16 %v386
        %v423 = vunpack.c.l.b16 %v387
        %v424 = vunpack.c.l.b16 %v388
        %v425 = vpack.c.b16 %v410, %v409
        %v426 = vpack.c.b16 %v412, %v411
        %v427 = vpack.c.b16 %v414, %v413
        %v428 = vpack.c.b16 %v416, %v415
        %v429 = vpack.c.b16 %v418, %v417
        %v430 = vpack.c.b16 %v420, %v419
        %v431 = vpack.c.b16 %v422, %v421
        %v432 = vpack.c.b16 %v424, %v423
        %441 = vmatpush.bf16.msra.mxu0 %v432
        %442 = vmatpush.bf16.msra.mxu0 %v431
        %443 = vmatpush.bf16.msra.mxu0 %v430
        %444 = vmatpush.bf16.msra.mxu0 %v429
        %445 = vmatpush.bf16.msra.mxu0 %v428
        %446 = vmatpush.bf16.msra.mxu0 %v427
        %447 = vmatpush.bf16.msra.mxu0 %v426
        %448 = vmatpush.bf16.msra.mxu0 %v425
        %449 = vmatmul.bf16.gmra.mxu0 %v372
        %v450 = vpop.f32.mrf.mxu0
        %v451 = vadd.f32 %v391, %v450
        %v452 = vpop.f32.mrf.mxu0
        %v453 = vadd.f32 %v391, %v452
        %454 = vdwg.mxu0
        %455 = vst [vmem:[%s277] sm:$0xff] %v451
        %456 = vst [vmem:[%s277 + $0x8] sm:$0xff] %v453
        %s457 = sand.u32 %s141, 1
        %s458 = scalar_lea.sflag [#allocation4], %s457
        %s459 = sand.u32 %s141, 1
        %s460 = smul.addr %s459, 16
        %s461 = scalar_lea.vmem [#allocation8], %s460
        // Predicated region
        $region53: #{tpu_custom_call.1} parent=39 // pred_check
          %p462 = pneg %p151
        $region54: #{tpu_custom_call.1} parent=39 // pred_check_branch
          %464 = sbr.rel (%p462) target = $region56
        $region55: #{tpu_custom_call.1} parent=39 // pred_region
          %s465 = smul.u32 2, %s23
          %467 = vsyncadd %s458, 0
          %s468 = smul.addr %s465, 8
          %s469 = scalar_lea.hbm %s5, %s468
          %s470 = sshll.u32 %s461, 4
          %s471 = int_to_ptr.vmem [resolvable:$true] %s470
          %s472 = sshll.u32 %s469, 4
          %s473 = int_to_ptr.hbm [resolvable:$true] %s472
          %478 = dma.vmem_to_hbm [thread:$0]  %s471, 256, %s473, %s458, 128, 128, 8
        $region56: #{tpu_custom_call.1} parent=39 // pred_fallthru
          _
      $region40: #{tpu_custom_call.1} parent=5 // pred_fallthru
        _
      %p479 = scmp.le.s32.totalorder 2, %s18
      // Predicated region
      $region57: #{tpu_custom_call.1} parent=5 // pred_check
        %p480 = pneg %p479
      $region58: #{tpu_custom_call.1} parent=5 // pred_check_branch
        %482 = sbr.rel (%p480) target = $region60
      $region59: #{tpu_custom_call.1} parent=5 // pred_region
        %s483 = ssub.s32 %s18, 2
        // Predicated region
        $region61: #{tpu_custom_call.1} parent=59 // pred_check
          %p484 = pneg %p157
        $region62: #{tpu_custom_call.1} parent=59 // pred_check_branch
          %486 = sbr.rel (%p484) target = $region64
        $region63: #{tpu_custom_call.1} parent=59 // pred_region
          %s487 = sand.u32 %s142, 1
          %s488 = scalar_lea.sflag [#allocation4], %s487
          %s489 = sand.u32 %s142, 1
          %s490 = smul.addr %s489, 16
          %s491 = scalar_lea.vmem [#allocation8], %s490
          %493 = dma.done %s488, 256
        $region64: #{tpu_custom_call.1} parent=59 // pred_fallthru
          _
      $region60: #{tpu_custom_call.1} parent=5 // pred_fallthru
        _
    $region6: #{tpu_custom_call.1} parent=1 // loop_footer
      %s22 = sadd.s32 1, %s18
    $region7: #{tpu_custom_call.1} parent=1 // loop_footer_branch
      %17 = sbr.rel target = $region3
    $region8: #{tpu_custom_call.1} parent=1 // loop_exit
      _
    %494 = vsyncpa [#allocation3], 1
    %s495 = scalar_lea.sflag [#allocation3], 1
    %496 = vsyncpa %s495, 1
    %497 = vsyncpa [#allocation6], 1
    %498 = vsyncpa [#allocation4], 1
    %s499 = scalar_lea.sflag [#allocation4], 1
    %500 = vsyncpa %s499, 1

</llo_original>
